<compile_context>
chip_gen: v6e
topology: v6e:2x2x1
jax: 0.10.0
libtpu: 0.0.40
codegen_flags: <defaults>
</compile_context>

<pallas_src>
import jax
import jax.numpy as jnp
from jax.experimental import pallas as pl
from jax.experimental.pallas import tpu as pltpu


_MB = 1024 * 1024


def _round_up(x, m):
    return (x + m - 1) // m * m


def _cdiv(a, b):
    return -(-a // b)


def _vmem_capacity_bytes():
    """Per-core VMEM capacity; conservative (v7x-sized) fallback if unknown."""
    try:
        return int(pltpu.get_tpu_info().vmem_capacity_bytes)
    except Exception:   # attribute / backend differences -> assume smallest gen
        return 64 * _MB


def clip_head_kernel(scale_ref,      # SMEM (1,): logit_scale (pre-exp)
                     img_ref,        # (tm, tk)  bf16  flattened image K-slice
                     wimg_ref,       # (tk, Dp)  bf16  image-projection K-slice
                     txt_ref,        # (Bn, Ep)  bf16  pooled text embeddings
                     wtxt_ref,       # (Ep, Dp)  bf16  text projection
                     li_ref,         # out (tm, Bn) f32 logits_per_image tile
                     acc_ref):       # scratch (tm, Dp) f32 image-feat accum
    # grid = (m_tiles [parallel], k_tiles [reduction, innermost])
    k = pl.program_id(1)

    @pl.when(k == 0)
    def _():
        acc_ref[...] = jnp.zeros_like(acc_ref)

    # Streamed image projection: accumulate over the K grid axis (MXU, f32 acc).
    acc_ref[...] += jnp.dot(img_ref[...], wimg_ref[...],
                            preferred_element_type=jnp.float32)

    @pl.when(k == pl.num_programs(1) - 1)
    def _():
        scale = jnp.exp(scale_ref[0])            # scalar-slot work, once/tile

        img_feat = acc_ref[...]                                   # (tm, Dp) f32
        txt_feat = jnp.dot(txt_ref[...], wtxt_ref[...],
                           preferred_element_type=jnp.float32)    # (Bn, Dp) f32

        # L2 normalize along the feature axis; fold exp(logit_scale) into the
        # per-row image factor (merges into the existing elementwise pass
        # instead of an extra (tm,Bn) multiply on the logits).  The tiny eps
        # only guards the all-zero padded rows; real rows are unaffected.
        img_ss = jnp.sum(img_feat * img_feat, axis=-1, keepdims=True)
        txt_ss = jnp.sum(txt_feat * txt_feat, axis=-1, keepdims=True)
        img_n = (img_feat
                 * (scale * jax.lax.rsqrt(jnp.maximum(img_ss, 1e-30)))
                 ).astype(jnp.bfloat16)
        txt_n = (txt_feat
                 * jax.lax.rsqrt(jnp.maximum(txt_ss, 1e-30))
                 ).astype(jnp.bfloat16)

        # Contract dim 1 of both operands -> (tm, Bn); no transposed operand,
        # bf16 MXU operands with f32 accumulation.
        dn = (((1,), (1,)), ((), ()))
        li_ref[...] = jax.lax.dot_general(img_n, txt_n, dn,
                                          preferred_element_type=jnp.float32)


def prepare_params(params):
    """One-time prepare: pad + bf16-cast weights, pick a generation-aware tk.

    Keeps the per-call forward free of large HBM copies of the weights.
    """
    w_img = params["w_img"].astype(jnp.float32)      # (K, D)
    w_txt = params["w_txt"].astype(jnp.float32)      # (E, D)
    K, D = w_img.shape
    E = w_txt.shape[0]

    # MXU-friendly N-dim rounding: 256 when the real D is already >=256
    # (v6e/v7x MXUs are 2x256x256), otherwise 128 (native on v5e, no extra pad).
    Dp = _round_up(D, 256) if D >= 256 else _round_up(max(D, 128), 128)
    Ep = _round_up(max(E, 128), 128)

    # VMEM budget: ~75% of physical capacity is the scoped limit; half of that
    # is given to the double-buffered K stream, the rest covers resident
    # txt/wtxt blocks, the f32 accumulator and the logits output tiles.
    vmem_cap = _vmem_capacity_bytes()
    usable = min((vmem_cap * 3) // 4, 96 * _MB)
    stream_budget = usable // 2

    tm_max = 256                                   # image-row tile upper bound
    # bytes/column of K for the double-buffered bf16 stream: 2 bufs * 2 B *
    # (tm rows + Dp cols)
    tk_cap = max(128, (stream_budget // (4 * (tm_max + Dp))) // 128 * 128)

    Kp0 = _round_up(max(K, 128), 128)
    nk = max(1, _cdiv(Kp0, tk_cap))                # == 1 when everything fits
    tk = _round_up(_cdiv(Kp0, nk), 128)
    Kp = tk * nk

    def pad2(x, r, c):
        return jnp.pad(x, ((0, r - x.shape[0]), (0, c - x.shape[1])))

    return {
        "w_img": pad2(w_img, Kp, Dp).astype(jnp.bfloat16),   # (Kp, Dp) bf16
        "w_txt": pad2(w_txt, Ep, Dp).astype(jnp.bfloat16),   # (Ep, Dp) bf16
        "tok_embed": params["tok_embed"],
        "logit_scale": params["logit_scale"].reshape(1).astype(jnp.float32),
        "dims": dict(K=K, D=D, E=E, Kp=Kp, Dp=Dp, Ep=Ep, tk=tk, nk=nk,
                     tm_max=tm_max, vmem_limit=int(usable)),
    }


def clip_forward(images, texts, prepared):
    """images: (B, C, H, W) float32, texts: (B, S) int32 token ids."""
    dims = prepared["dims"]
    K, Kp, Dp, Ep = dims["K"], dims["Kp"], dims["Dp"], dims["Ep"]
    tk, nk, tm_max = dims["tk"], dims["nk"], dims["tm_max"]

    B = images.shape[0]

    # glue: flatten images row-major (matches torch .flatten(1))
    img_flat = images.reshape(B, -1).astype(jnp.float32)
    assert img_flat.shape[1] == K

    # glue: token embedding lookup + mean pooling over sequence (gather has no
    # clean single-tile Pallas form at this size; kept in JAX)
    tok_emb = prepared["tok_embed"][texts]            # (B, S, E)
    txt_pooled = jnp.mean(tok_emb, axis=1)            # (B, E)

    # Image rows (sublane / M dim of the logits): pad only to a multiple of 8,
    # split into <=tm_max-row tiles for the "parallel" grid axis (2 TCs on v7x).
    Bm0 = _round_up(B, 8)
    n_m = max(1, _cdiv(Bm0, tm_max))
    tm = _round_up(_cdiv(Bm0, n_m), 8)
    Bm = tm * n_m

    # Text rows (lane / N dim of the logits): multiple of 128 -> lane-dense vst.
    Bn = _round_up(max(B, 128), 128)

    def pad2(x, r, c):
        return jnp.pad(x, ((0, r - x.shape[0]), (0, c - x.shape[1])))

    # bf16 activations (MXU throughput + halved DMA); f32 accumulation in-kernel.
    img_p = pad2(img_flat, Bm, Kp).astype(jnp.bfloat16)       # (Bm, Kp)
    txt_p = pad2(txt_pooled, Bn, Ep).astype(jnp.bfloat16)     # (Bn, Ep)

    smem = pl.BlockSpec(memory_space=pltpu.MemorySpace.SMEM)

    # TODO(synk): once pipeline_mode=pl.Buffered(1) is verified on the target
    # jax build, mark the resident txt / w_txt specs single-buffered to free
    # their second buffer (most valuable under v7x's 64 MiB VMEM ceiling).
    li_p = pl.pallas_call(
        clip_head_kernel,
        out_shape=jax.ShapeDtypeStruct((Bm, Bn), jnp.float32),
        grid=(n_m, nk),
        in_specs=[
            smem,                                             # logit_scale
            pl.BlockSpec((tm, tk), lambda m, k: (m, k)),      # image rows (K tile)
            pl.BlockSpec((tk, Dp), lambda m, k: (k, 0)),      # w_img stream
            pl.BlockSpec((Bn, Ep), lambda m, k: (0, 0)),      # pooled text (resident)
            pl.BlockSpec((Ep, Dp), lambda m, k: (0, 0)),      # w_txt (resident)
        ],
        out_specs=pl.BlockSpec((tm, Bn), lambda m, k: (m, 0)),
        scratch_shapes=[pltpu.VMEM((tm, Dp), jnp.float32)],
        compiler_params=pltpu.CompilerParams(
            dimension_semantics=("parallel", "arbitrary"),    # rows ||, K = red.
            vmem_limit_bytes=dims["vmem_limit"]),
    )(prepared["logit_scale"], img_p, prepared["w_img"], txt_p,
      prepared["w_txt"])

    logits_per_image = li_p[:B, :B]
    # Exact transpose (matches PyTorch's logits_per_image.t()) — no second
    # matmul, no extra (B,B) output buffer.
    logits_per_text = logits_per_image.T
    return logits_per_image, logits_per_text


def init_params(key, img_in_dim, txt_embed_dim, embed_dim, vocab_size):
    k1, k2, k3 = jax.random.split(key, 3)
    return {
        "w_img": jax.random.normal(k1, (img_in_dim, embed_dim),
                                   jnp.float32) * 0.02,
        "w_txt": jax.random.normal(k2, (txt_embed_dim, embed_dim),
                                   jnp.float32) * 0.02,
        "tok_embed": jax.random.normal(k3, (vocab_size, txt_embed_dim),
                                       jnp.float32) * 0.02,
        # CLIP default: logit_scale = log(1/0.07); kernel applies exp().
        "logit_scale": jnp.array([jnp.log(1.0 / 0.07)], jnp.float32),
    }


if __name__ == "__main__":
    key = jax.random.PRNGKey(0)
    k_img, k_txt, k_par = jax.random.split(key, 3)

    B, C, H, W = 2, 4, 16, 16          # image batch (NCHW)
    S, VOCAB = 8, 32                   # text seq len, vocab size
    E_TXT, D = 32, 64                  # text embed dim, shared CLIP embed dim

    images = jax.random.normal(k_img, (B, C, H, W), jnp.float32)
    texts = jax.random.randint(k_txt, (B, S), 0, VOCAB, jnp.int32)

    params = init_params(k_par, C * H * W, E_TXT, D, VOCAB)
    prepared = prepare_params(params)   # one-time weight pad + bf16 cast

    logits_per_image, logits_per_text = clip_forward(images, texts, prepared)
    jax.block_until_ready((logits_per_image, logits_per_text))

    # sanity: shapes + exact transpose relation + finite logits
    assert logits_per_image.shape == (B, B)
    assert logits_per_text.shape == (B, B)
    assert bool(jnp.allclose(logits_per_text, logits_per_image.T,
                             rtol=1e-6, atol=1e-6))
    assert bool(jnp.all(jnp.isfinite(logits_per_image)))

    print("KERNEL_OK")
</pallas_src>

<mosaic_0001>
module attributes {stable_mosaic.version = 11 : i64} {
  func.func @clip_head_kernel(%arg0: i32, %arg1: i32, %arg2: memref<1xf32, #tpu.memory_space<smem>>, %arg3: memref<8x1024xbf16, #tpu.memory_space<vmem>>, %arg4: memref<1024x128xbf16, #tpu.memory_space<vmem>>, %arg5: memref<128x128xbf16, #tpu.memory_space<vmem>>, %arg6: memref<128x128xbf16, #tpu.memory_space<vmem>>, %arg7: memref<8x128xf32, #tpu.memory_space<vmem>>, %arg8: memref<8x128xf32, #tpu.memory_space<vmem>>) attributes {dimension_semantics = [#tpu.dimension_semantics<parallel>, #tpu.dimension_semantics<arbitrary>], iteration_bounds = array<i64: 1, 1>, scalar_prefetch = 0 : i64, scratch_operands = 1 : i64, tpu.core_type = #tpu.core_type<tc>, window_params = [{transform_indices = @transform_0, window_bounds = array<i64: 1>}, {transform_indices = @transform_1, window_bounds = array<i64: 8, 1024>}, {transform_indices = @transform_2, window_bounds = array<i64: 1024, 128>}, {pipeline_mode = #tpu.pipeline_mode<synchronous>, transform_indices = @transform_3, window_bounds = array<i64: 128, 128>}, {pipeline_mode = #tpu.pipeline_mode<synchronous>, transform_indices = @transform_4, window_bounds = array<i64: 128, 128>}, {transform_indices = @transform_5, window_bounds = array<i64: 8, 128>}]} {
    %c0_i32 = arith.constant 0 : i32
    %0 = arith.cmpi eq, %arg1, %c0_i32 : i32
    %1 = arith.extui %0 : i1 to i32
    %c0_i32_0 = arith.constant 0 : i32
    %2 = arith.cmpi ne, %1, %c0_i32_0 : i32
    scf.if %2 {
      %cst_10 = arith.constant 0.000000e+00 : f32
      %12 = vector.broadcast %cst_10 : f32 to vector<8x128xf32>
      %c0_11 = arith.constant 0 : index
      %c0_12 = arith.constant 0 : index
      %13 = vector.load %arg8[%c0_11, %c0_12] : memref<8x128xf32, #tpu.memory_space<vmem>>, vector<8x128xf32>
      tpu.vector_store %arg8[%c0_11, %c0_12], %12 {strides = array<i32>} : memref<8x128xf32, #tpu.memory_space<vmem>>, vector<8x128xf32>,
    } else {
    }
    %c0 = arith.constant 0 : index
    %c0_1 = arith.constant 0 : index
    %3 = vector.load %arg8[%c0, %c0_1] : memref<8x128xf32, #tpu.memory_space<vmem>>, vector<8x128xf32>
    %c0_2 = arith.constant 0 : index
    %c0_3 = arith.constant 0 : index
    %4 = vector.load %arg3[%c0_2, %c0_3] : memref<8x1024xbf16, #tpu.memory_space<vmem>>, vector<8x1024xbf16>
    %c0_4 = arith.constant 0 : index
    %c0_5 = arith.constant 0 : index
    %5 = vector.load %arg4[%c0_4, %c0_5] : memref<1024x128xbf16, #tpu.memory_space<vmem>>, vector<1024x128xbf16>
    %cst = arith.constant dense<0.000000e+00> : vector<8x128xf32>
    %6 = tpu.matmul %4, %5, %cst {dimension_numbers = #tpu.dot_dimension_numbers<[1], [0], [0], [1], [0, 0, 1, 1], [], []>} : vector<8x1024xbf16>, vector<1024x128xbf16>, vector<8x128xf32> -> vector<8x128xf32>
    %7 = arith.addf %3, %6 : vector<8x128xf32>
    %c0_6 = arith.constant 0 : index
    %c0_7 = arith.constant 0 : index
    %8 = vector.load %arg8[%c0_6, %c0_7] : memref<8x128xf32, #tpu.memory_space<vmem>>, vector<8x128xf32>
    tpu.vector_store %arg8[%c0_6, %c0_7], %7 {strides = array<i32>} : memref<8x128xf32, #tpu.memory_space<vmem>>, vector<8x128xf32>,
    %c0_i32_8 = arith.constant 0 : i32
    %9 = arith.cmpi eq, %arg1, %c0_i32_8 : i32
    %10 = arith.extui %9 : i1 to i32
    %c0_i32_9 = arith.constant 0 : i32
    %11 = arith.cmpi ne, %10, %c0_i32_9 : i32
    scf.if %11 {
      %c0_10 = arith.constant 0 : index
      %12 = memref.load %arg2[%c0_10] : memref<1xf32, #tpu.memory_space<smem>>
      %13 = math.exp %12 : f32
      %c0_11 = arith.constant 0 : index
      %c0_12 = arith.constant 0 : index
      %14 = vector.load %arg8[%c0_11, %c0_12] : memref<8x128xf32, #tpu.memory_space<vmem>>, vector<8x128xf32>
      %c0_13 = arith.constant 0 : index
      %c0_14 = arith.constant 0 : index
      %15 = vector.load %arg5[%c0_13, %c0_14] : memref<128x128xbf16, #tpu.memory_space<vmem>>, vector<128x128xbf16>
      %c0_15 = arith.constant 0 : index
      %c0_16 = arith.constant 0 : index
      %16 = vector.load %arg6[%c0_15, %c0_16] : memref<128x128xbf16, #tpu.memory_space<vmem>>, vector<128x128xbf16>
      %cst_17 = arith.constant dense<0.000000e+00> : vector<128x128xf32>
      %17 = tpu.matmul %15, %16, %cst_17 {dimension_numbers = #tpu.dot_dimension_numbers<[1], [0], [0], [1], [0, 0, 1, 1], [], []>} : vector<128x128xbf16>, vector<128x128xbf16>, vector<128x128xf32> -> vector<128x128xf32>
      %18 = arith.mulf %14, %14 : vector<8x128xf32>
      %cst_18 = arith.constant dense<0.000000e+00> : vector<8xf32>
      %19 = vector.multi_reduction <add>, %18, %cst_18 [1] : vector<8x128xf32> to vector<8xf32>
      %20 = vector.shape_cast %19 : vector<8xf32> to vector<8x1xf32>
      %21 = arith.mulf %17, %17 : vector<128x128xf32>
      %cst_19 = arith.constant dense<0.000000e+00> : vector<128xf32>
      %22 = vector.multi_reduction <add>, %21, %cst_19 [1] : vector<128x128xf32> to vector<128xf32>
      %23 = vector.shape_cast %22 : vector<128xf32> to vector<128x1xf32>
      %cst_20 = arith.constant 1.000000e-30 : f32
      %24 = vector.broadcast %cst_20 : f32 to vector<8x1xf32>
      %25 = arith.maximumf %20, %24 : vector<8x1xf32>
      %26 = math.rsqrt %25 : vector<8x1xf32>
      %27 = vector.broadcast %13 : f32 to vector<8x1xf32>
      %28 = arith.mulf %27, %26 : vector<8x1xf32>
      %29 = vector.broadcast %28 : vector<8x1xf32> to vector<8x128xf32>
      %30 = arith.mulf %14, %29 : vector<8x128xf32>
      %31 = arith.truncf %30 : vector<8x128xf32> to vector<8x128xbf16>
      %cst_21 = arith.constant 1.000000e-30 : f32
      %32 = vector.broadcast %cst_21 : f32 to vector<128x1xf32>
      %33 = arith.maximumf %23, %32 : vector<128x1xf32>
      %34 = math.rsqrt %33 : vector<128x1xf32>
      %35 = vector.broadcast %34 : vector<128x1xf32> to vector<128x128xf32>
      %36 = arith.mulf %17, %35 : vector<128x128xf32>
      %37 = arith.truncf %36 : vector<128x128xf32> to vector<128x128xbf16>
      %cst_22 = arith.constant dense<0.000000e+00> : vector<8x128xf32>
      %38 = tpu.matmul %31, %37, %cst_22 {dimension_numbers = #tpu.dot_dimension_numbers<[1], [1], [0], [0], [0, 0, 1, 0], [], []>} : vector<8x128xbf16>, vector<128x128xbf16>, vector<8x128xf32> -> vector<8x128xf32>
      %c0_23 = arith.constant 0 : index
      %c0_24 = arith.constant 0 : index
      %39 = vector.load %arg7[%c0_23, %c0_24] : memref<8x128xf32, #tpu.memory_space<vmem>>, vector<8x128xf32>
      tpu.vector_store %arg7[%c0_23, %c0_24], %38 {strides = array<i32>} : memref<8x128xf32, #tpu.memory_space<vmem>>, vector<8x128xf32>,
    } else {
    }
    return
  }
  func.func @transform_0(%arg0: i32, %arg1: i32) -> i32 {
    %c0_i32 = arith.constant 0 : i32
    %c0_i32_0 = arith.constant 0 : i32
    return %c0_i32 : i32
  }
  func.func @transform_1(%arg0: i32, %arg1: i32) -> (i32, i32) {
    %c0_i32 = arith.constant 0 : i32
    return %arg0, %arg1 : i32, i32
  }
  func.func @transform_2(%arg0: i32, %arg1: i32) -> (i32, i32) {
    %c0_i32 = arith.constant 0 : i32
    %c0_i32_0 = arith.constant 0 : i32
    return %arg1, %c0_i32 : i32, i32
  }
  func.func @transform_3(%arg0: i32, %arg1: i32) -> (i32, i32) {
    %c0_i32 = arith.constant 0 : i32
    %c0_i32_0 = arith.constant 0 : i32
    %c0_i32_1 = arith.constant 0 : i32
    return %c0_i32, %c0_i32_0 : i32, i32
  }
  func.func @transform_4(%arg0: i32, %arg1: i32) -> (i32, i32) {
    %c0_i32 = arith.constant 0 : i32
    %c0_i32_0 = arith.constant 0 : i32
    %c0_i32_1 = arith.constant 0 : i32
    return %c0_i32, %c0_i32_0 : i32, i32
  }
  func.func @transform_5(%arg0: i32, %arg1: i32) -> (i32, i32) {
    %c0_i32 = arith.constant 0 : i32
    %c0_i32_0 = arith.constant 0 : i32
    return %arg0, %c0_i32 : i32, i32
  }
}

</mosaic_0001>

<llo_original>
// kernel: tpu_custom_call.1
$region0: #{tpu_custom_call.1}
  #allocation0 [shape = 'u32[]', space=smem, size = 0x4, offset = 0x4, fixed_abs, tag = 'smem constant byte address 0x4 - core index']
  #allocation1 [shape = 'u32[144,128]{1,0:T(1,128)}', space=vmem, size = 0x12000, scoped, tag = 'internal scratch']
  #allocation2 [shape = 'f32[8,128]{1,0:T(8,128)}', space=vmem, size = 0x1000, scoped, tag = 'scratch operand']
  #allocation3 [shape = 'f32[1]{0:T(128)S(6)}', space=smem, size = 0x200, scoped, tag = 'scoped memory for tpu_custom_call.1']
  %s0 = inlined_call_operand.<no memory space> [shape: f32[1], index: 0, kind: input, shape index: {}]
  %s1 = inlined_call_operand.hbm [shape: bf16[8,1024], index: 1, kind: input, shape index: {}]
  %s2 = inlined_call_operand.hbm [shape: bf16[1024,128], index: 2, kind: input, shape index: {}]
  %s3 = inlined_call_operand.hbm [shape: bf16[128,128], index: 3, kind: input, shape index: {}]
  %s4 = inlined_call_operand.hbm [shape: bf16[128,128], index: 4, kind: input, shape index: {}]
  %s5 = inlined_call_operand.hbm [shape: f32[8,128], index: 5, kind: output, shape index: {}]
  %s6 = sld [smem:[#allocation0]]
  $region54: #{tpu_custom_call.1} parent=0
    _
  %s8 = ssub.s32 1, %s6
  %s9 = scalar_select 0, %s8, %s6
  %10 = sst [smem:[#allocation3]] %s0
  $region1: #{tpu_custom_call.1} parent=0
    #allocation4 [shape = 'u8[16384]{0}', space=vmem, size = 0x4000, scoped, tag = 'input window, operand 1, single buffered']
    #allocation5 [shape = 's32[1]{0}', space=sflag, size = 0x4, scoped, tag = 'scoped memory for tpu_custom_call.1']
    #allocation6 [shape = 's32[1]{0}', space=sflag, size = 0x4, scoped, tag = 'scoped memory for tpu_custom_call.1']
    #allocation7 [shape = 'u8[262144]{0}', space=vmem, size = 0x40000, scoped, tag = 'input window, operand 2, single buffered']
    #allocation8 [shape = 's32[1]{0}', space=sflag, size = 0x4, scoped, tag = 'scoped memory for tpu_custom_call.1']
    #allocation9 [shape = 'u8[32768]{0}', space=vmem, size = 0x8000, scoped, tag = 'input window, operand 3, single buffered']
    #allocation10 [shape = 'u8[32768]{0}', space=vmem, size = 0x8000, scoped, tag = 'input window, operand 4, single buffered']
    #allocation11 [shape = 's32[1]{0}', space=sflag, size = 0x4, scoped, tag = 'scoped memory for tpu_custom_call.1']
    #allocation12 [shape = 'u8[4096]{0}', space=vmem, size = 0x1000, scoped, tag = 'output window, operand 0, single buffered']
    %11 = vsyncpa [#allocation5], 0
    %12 = vsyncpa [#allocation8], 0
    %13 = vsyncpa [#allocation11], 0
    %14 = vsyncpa [#allocation6], 0
    // Predicated region
    $region2: #{tpu_custom_call.1} parent=1 // pred_check
      _
    $region3: #{tpu_custom_call.1} parent=1 // pred_check_branch
      %16 = sbr.rel (0) target = $region5
    $region4: #{tpu_custom_call.1} parent=1 // pred_region
      _
    $region5: #{tpu_custom_call.1} parent=1 // pred_fallthru
      _
    // Predicated region
    $region6: #{tpu_custom_call.1} parent=1 // pred_check
      _
    $region7: #{tpu_custom_call.1} parent=1 // pred_check_branch
      %18 = sbr.rel (0) target = $region9
    $region8: #{tpu_custom_call.1} parent=1 // pred_region
      %s20 = ssub.s32 512, 512
      %21 = vsyncadd [#allocation5], %s20
      %s23 = sshll.u32 [#allocation4], 4
      %s24 = int_to_ptr.vmem [resolvable:$true] %s23
      %26 = dma.hbm_to_vmem [thread:$0]  %s1, 512, %s24, [#allocation5]
    $region9: #{tpu_custom_call.1} parent=1 // pred_fallthru
      _
    // Predicated region
    $region10: #{tpu_custom_call.1} parent=1 // pred_check
      _
    $region11: #{tpu_custom_call.1} parent=1 // pred_check_branch
      %28 = sbr.rel (0) target = $region13
    $region12: #{tpu_custom_call.1} parent=1 // pred_region
      %s30 = ssub.s32 8192, 8192
      %31 = vsyncadd [#allocation8], %s30
      %s32 = sshll.u32 [#allocation7], 4
      %s33 = int_to_ptr.vmem [resolvable:$true] %s32
      %38 = dma.hbm_to_vmem [thread:$0]  %s2, 8192, %s33, [#allocation8], 64, 64, 4
    $region13: #{tpu_custom_call.1} parent=1 // pred_fallthru
      _
    // Predicated region
    $region14: #{tpu_custom_call.1} parent=1 // pred_check
      _
    $region15: #{tpu_custom_call.1} parent=1 // pred_check_branch
      %40 = sbr.rel (0) target = $region17
    $region16: #{tpu_custom_call.1} parent=1 // pred_region
      %s42 = ssub.s32 1024, 1024
      %43 = vsyncadd [#allocation8], %s42
      %s44 = sshll.u32 [#allocation9], 4
      %s45 = int_to_ptr.vmem [resolvable:$true] %s44
      %50 = dma.hbm_to_vmem [thread:$0]  %s3, 1024, %s45, [#allocation8], 64, 64, 4
    $region17: #{tpu_custom_call.1} parent=1 // pred_fallthru
      _
    // Predicated region
    $region18: #{tpu_custom_call.1} parent=1 // pred_check
      _
    $region19: #{tpu_custom_call.1} parent=1 // pred_check_branch
      %52 = sbr.rel (0) target = $region21
    $region20: #{tpu_custom_call.1} parent=1 // pred_region
      %s54 = ssub.s32 1024, 1024
      %55 = vsyncadd [#allocation11], %s54
      %s56 = sshll.u32 [#allocation10], 4
      %s57 = int_to_ptr.vmem [resolvable:$true] %s56
      %62 = dma.hbm_to_vmem [thread:$0]  %s4, 1024, %s57, [#allocation11], 64, 64, 4
    $region21: #{tpu_custom_call.1} parent=1 // pred_fallthru
      _
    // Predicated region
    $region22: #{tpu_custom_call.1} parent=1 // pred_check
      _
    $region23: #{tpu_custom_call.1} parent=1 // pred_check_branch
      %64 = sbr.rel (0) target = $region25
    $region24: #{tpu_custom_call.1} parent=1 // pred_region
      %65 = dma.done [#allocation5], 512
    $region25: #{tpu_custom_call.1} parent=1 // pred_fallthru
      _
    // Predicated region
    $region26: #{tpu_custom_call.1} parent=1 // pred_check
      _
    $region27: #{tpu_custom_call.1} parent=1 // pred_check_branch
      %67 = sbr.rel (0) target = $region29
    $region28: #{tpu_custom_call.1} parent=1 // pred_region
      %68 = dma.done [#allocation8], 8192
    $region29: #{tpu_custom_call.1} parent=1 // pred_fallthru
      _
    // Predicated region
    $region30: #{tpu_custom_call.1} parent=1 // pred_check
      _
    $region31: #{tpu_custom_call.1} parent=1 // pred_check_branch
      %70 = sbr.rel (0) target = $region33
    $region32: #{tpu_custom_call.1} parent=1 // pred_region
      %71 = dma.done [#allocation8], 1024
    $region33: #{tpu_custom_call.1} parent=1 // pred_fallthru
      _
    // Predicated region
    $region34: #{tpu_custom_call.1} parent=1 // pred_check
      _
    $region35: #{tpu_custom_call.1} parent=1 // pred_check_branch
      %73 = sbr.rel (0) target = $region37
    $region36: #{tpu_custom_call.1} parent=1 // pred_region
      %74 = dma.done [#allocation11], 1024
    $region37: #{tpu_custom_call.1} parent=1 // pred_fallthru
      _
    %p76 = scmp.eq.s32.totalorder 0, 0
    // Predicated region
    $region38: #{tpu_custom_call.1} parent=1 // pred_check
      %p77 = pneg %p76
    $region39: #{tpu_custom_call.1} parent=1 // pred_check_branch
      %79 = sbr.rel (%p77) target = $region41
    $region40: #{tpu_custom_call.1} parent=1 // pred_region
      %80 = vst [vmem:[#allocation2] sm:$0xff] 0.0
    $region41: #{tpu_custom_call.1} parent=1 // pred_fallthru
      _
    %v81 = vld [vmem:[#allocation2] sm:$0xff]
    %v82 = vld [vmem:[#allocation4] sm:$0xff]
    %v83 = vld [vmem:[#allocation4 + $0x8] sm:$0xff]
    %v84 = vld [vmem:[#allocation4 + $0x10] sm:$0xff]
    %v85 = vld [vmem:[#allocation4 + $0x18] sm:$0xff]
    %v86 = vld [vmem:[#allocation7] sm:$0xf]
    %v87 = vld [vmem:[#allocation7 + $0x4] sm:$0xf]
    %v88 = vld [vmem:[#allocation7 + $0x8] sm:$0xf]
    %v89 = vld [vmem:[#allocation7 + $0xc] sm:$0xf]
    %v90 = vld [vmem:[#allocation7 + $0x10] sm:$0xf]
    %v91 = vld [vmem:[#allocation7 + $0x14] sm:$0xf]
    %v92 = vld [vmem:[#allocation7 + $0x18] sm:$0xf]
    %v93 = vld [vmem:[#allocation7 + $0x1c] sm:$0xf]
    %v94 = vld [vmem:[#allocation7 + $0x20] sm:$0xf]
    %v95 = vld [vmem:[#allocation7 + $0x24] sm:$0xf]
    %v96 = vld [vmem:[#allocation7 + $0x28] sm:$0xf]
    %v97 = vld [vmem:[#allocation7 + $0x2c] sm:$0xf]
    %v98 = vld [vmem:[#allocation7 + $0x30] sm:$0xf]
    %v99 = vld [vmem:[#allocation7 + $0x34] sm:$0xf]
    %v100 = vld [vmem:[#allocation7 + $0x38] sm:$0xf]
    %v101 = vld [vmem:[#allocation7 + $0x3c] sm:$0xf]
    %v102 = vld [vmem:[#allocation7 + $0x40] sm:$0xf]
    %v103 = vld [vmem:[#allocation7 + $0x44] sm:$0xf]
    %v104 = vld [vmem:[#allocation7 + $0x48] sm:$0xf]
    %v105 = vld [vmem:[#allocation7 + $0x4c] sm:$0xf]
    %v106 = vld [vmem:[#allocation7 + $0x50] sm:$0xf]
    %v107 = vld [vmem:[#allocation7 + $0x54] sm:$0xf]
    %v108 = vld [vmem:[#allocation7 + $0x58] sm:$0xf]
    %v109 = vld [vmem:[#allocation7 + $0x5c] sm:$0xf]
    %v110 = vld [vmem:[#allocation7 + $0x60] sm:$0xf]
    %v111 = vld [vmem:[#allocation7 + $0x64] sm:$0xf]
    %v112 = vld [vmem:[#allocation7 + $0x68] sm:$0xf]
    %v113 = vld [vmem:[#allocation7 + $0x6c] sm:$0xf]
    %v114 = vld [vmem:[#allocation7 + $0x70] sm:$0xf]
    %v115 = vld [vmem:[#allocation7 + $0x74] sm:$0xf]
    %v116 = vld [vmem:[#allocation7 + $0x78] sm:$0xf]
    %v117 = vld [vmem:[#allocation7 + $0x7c] sm:$0xf]
    %v118 = vld [vmem:[#allocation7 + $0x80] sm:$0xf]
    %v119 = vld [vmem:[#allocation7 + $0x84] sm:$0xf]
    %v120 = vld [vmem:[#allocation7 + $0x88] sm:$0xf]
    %v121 = vld [vmem:[#allocation7 + $0x8c] sm:$0xf]
    %v122 = vld [vmem:[#allocation7 + $0x90] sm:$0xf]
    %v123 = vld [vmem:[#allocation7 + $0x94] sm:$0xf]
    %v124 = vld [vmem:[#allocation7 + $0x98] sm:$0xf]
    %v125 = vld [vmem:[#allocation7 + $0x9c] sm:$0xf]
    %v126 = vld [vmem:[#allocation7 + $0xa0] sm:$0xf]
    %v127 = vld [vmem:[#allocation7 + $0xa4] sm:$0xf]
    %v128 = vld [vmem:[#allocation7 + $0xa8] sm:$0xf]
    %v129 = vld [vmem:[#allocation7 + $0xac] sm:$0xf]
    %v130 = vld [vmem:[#allocation7 + $0xb0] sm:$0xf]
    %v131 = vld [vmem:[#allocation7 + $0xb4] sm:$0xf]
    %v132 = vld [vmem:[#allocation7 + $0xb8] sm:$0xf]
    %v133 = vld [vmem:[#allocation7 + $0xbc] sm:$0xf]
    %v134 = vld [vmem:[#allocation7 + $0xc0] sm:$0xf]
    %v135 = vld [vmem:[#allocation7 + $0xc4] sm:$0xf]
    %v136 = vld [vmem:[#allocation7 + $0xc8] sm:$0xf]
    %v137 = vld [vmem:[#allocation7 + $0xcc] sm:$0xf]
    %v138 = vld [vmem:[#allocation7 + $0xd0] sm:$0xf]
    %v139 = vld [vmem:[#allocation7 + $0xd4] sm:$0xf]
    %v140 = vld [vmem:[#allocation7 + $0xd8] sm:$0xf]
    %v141 = vld [vmem:[#allocation7 + $0xdc] sm:$0xf]
    %v142 = vld [vmem:[#allocation7 + $0xe0] sm:$0xf]
    %v143 = vld [vmem:[#allocation7 + $0xe4] sm:$0xf]
    %v144 = vld [vmem:[#allocation7 + $0xe8] sm:$0xf]
    %v145 = vld [vmem:[#allocation7 + $0xec] sm:$0xf]
    %v146 = vld [vmem:[#allocation7 + $0xf0] sm:$0xf]
    %v147 = vld [vmem:[#allocation7 + $0xf4] sm:$0xf]
    %v148 = vld [vmem:[#allocation7 + $0xf8] sm:$0xf]
    %v149 = vld [vmem:[#allocation7 + $0xfc] sm:$0xf]
    %v150 = vld [vmem:[#allocation7 + $0x100] sm:$0xf]
    %v151 = vld [vmem:[#allocation7 + $0x104] sm:$0xf]
    %v152 = vld [vmem:[#allocation7 + $0x108] sm:$0xf]
    %v153 = vld [vmem:[#allocation7 + $0x10c] sm:$0xf]
    %v154 = vld [vmem:[#allocation7 + $0x110] sm:$0xf]
    %v155 = vld [vmem:[#allocation7 + $0x114] sm:$0xf]
    %v156 = vld [vmem:[#allocation7 + $0x118] sm:$0xf]
    %v157 = vld [vmem:[#allocation7 + $0x11c] sm:$0xf]
    %v158 = vld [vmem:[#allocation7 + $0x120] sm:$0xf]
    %v159 = vld [vmem:[#allocation7 + $0x124] sm:$0xf]
    %v160 = vld [vmem:[#allocation7 + $0x128] sm:$0xf]
    %v161 = vld [vmem:[#allocation7 + $0x12c] sm:$0xf]
    %v162 = vld [vmem:[#allocation7 + $0x130] sm:$0xf]
    %v163 = vld [vmem:[#allocation7 + $0x134] sm:$0xf]
    %v164 = vld [vmem:[#allocation7 + $0x138] sm:$0xf]
    %v165 = vld [vmem:[#allocation7 + $0x13c] sm:$0xf]
    %v166 = vld [vmem:[#allocation7 + $0x140] sm:$0xf]
    %v167 = vld [vmem:[#allocation7 + $0x144] sm:$0xf]
    %v168 = vld [vmem:[#allocation7 + $0x148] sm:$0xf]
    %v169 = vld [vmem:[#allocation7 + $0x14c] sm:$0xf]
    %v170 = vld [vmem:[#allocation7 + $0x150] sm:$0xf]
    %v171 = vld [vmem:[#allocation7 + $0x154] sm:$0xf]
    %v172 = vld [vmem:[#allocation7 + $0x158] sm:$0xf]
    %v173 = vld [vmem:[#allocation7 + $0x15c] sm:$0xf]
    %v174 = vld [vmem:[#allocation7 + $0x160] sm:$0xf]
    %v175 = vld [vmem:[#allocation7 + $0x164] sm:$0xf]
    %v176 = vld [vmem:[#allocation7 + $0x168] sm:$0xf]
    %v177 = vld [vmem:[#allocation7 + $0x16c] sm:$0xf]
    %v178 = vld [vmem:[#allocation7 + $0x170] sm:$0xf]
    %v179 = vld [vmem:[#allocation7 + $0x174] sm:$0xf]
    %v180 = vld [vmem:[#allocation7 + $0x178] sm:$0xf]
    %v181 = vld [vmem:[#allocation7 + $0x17c] sm:$0xf]
    %v182 = vld [vmem:[#allocation7 + $0x180] sm:$0xf]
    %v183 = vld [vmem:[#allocation7 + $0x184] sm:$0xf]
    %v184 = vld [vmem:[#allocation7 + $0x188] sm:$0xf]
    %v185 = vld [vmem:[#allocation7 + $0x18c] sm:$0xf]
    %v186 = vld [vmem:[#allocation7 + $0x190] sm:$0xf]
    %v187 = vld [vmem:[#allocation7 + $0x194] sm:$0xf]
    %v188 = vld [vmem:[#allocation7 + $0x198] sm:$0xf]
    %v189 = vld [vmem:[#allocation7 + $0x19c] sm:$0xf]
    %v190 = vld [vmem:[#allocation7 + $0x1a0] sm:$0xf]
    %v191 = vld [vmem:[#allocation7 + $0x1a4] sm:$0xf]
    %v192 = vld [vmem:[#allocation7 + $0x1a8] sm:$0xf]
    %v193 = vld [vmem:[#allocation7 + $0x1ac] sm:$0xf]
    %v194 = vld [vmem:[#allocation7 + $0x1b0] sm:$0xf]
    %v195 = vld [vmem:[#allocation7 + $0x1b4] sm:$0xf]
    %v196 = vld [vmem:[#allocation7 + $0x1b8] sm:$0xf]
    %v197 = vld [vmem:[#allocation7 + $0x1bc] sm:$0xf]
    %v198 = vld [vmem:[#allocation7 + $0x1c0] sm:$0xf]
    %v199 = vld [vmem:[#allocation7 + $0x1c4] sm:$0xf]
    %v200 = vld [vmem:[#allocation7 + $0x1c8] sm:$0xf]
    %v201 = vld [vmem:[#allocation7 + $0x1cc] sm:$0xf]
    %v202 = vld [vmem:[#allocation7 + $0x1d0] sm:$0xf]
    %v203 = vld [vmem:[#allocation7 + $0x1d4] sm:$0xf]
    %v204 = vld [vmem:[#allocation7 + $0x1d8] sm:$0xf]
    %v205 = vld [vmem:[#allocation7 + $0x1dc] sm:$0xf]
    %v206 = vld [vmem:[#allocation7 + $0x1e0] sm:$0xf]
    %v207 = vld [vmem:[#allocation7 + $0x1e4] sm:$0xf]
    %v208 = vld [vmem:[#allocation7 + $0x1e8] sm:$0xf]
    %v209 = vld [vmem:[#allocation7 + $0x1ec] sm:$0xf]
    %v210 = vld [vmem:[#allocation7 + $0x1f0] sm:$0xf]
    %v211 = vld [vmem:[#allocation7 + $0x1f4] sm:$0xf]
    %v212 = vld [vmem:[#allocation7 + $0x1f8] sm:$0xf]
    %v213 = vld [vmem:[#allocation7 + $0x1fc] sm:$0xf]
    %v218 = vunpack.c.l.b16 %v82
    %v219 = vunpack.c.h.b16 %v82
    %v220 = vunpack.c.l.b16 %v83
    %v221 = vunpack.c.h.b16 %v83
    %v222 = vunpack.c.l.b16 %v84
    %v223 = vunpack.c.h.b16 %v84
    %v224 = vunpack.c.l.b16 %v85
    %v225 = vunpack.c.h.b16 %v85
    %v226 = vpack.c.b16 %v218, %v218
    %v227 = vpack.c.b16 %v219, %v219
    %v228 = vpack.c.b16 %v220, %v220
    %v229 = vpack.c.b16 %v221, %v221
    %v230 = vpack.c.b16 %v222, %v222
    %v231 = vpack.c.b16 %v223, %v223
    %v232 = vpack.c.b16 %v224, %v224
    %v233 = vpack.c.b16 %v225, %v225
    %v370 = vunpack.c.l.b16 %v86
    %v371 = vunpack.c.l.b16 %v87
    %v372 = vunpack.c.l.b16 %v88
    %v373 = vunpack.c.l.b16 %v89
    %v374 = vunpack.c.l.b16 %v90
    %v375 = vunpack.c.l.b16 %v91
    %v376 = vunpack.c.l.b16 %v92
    %v377 = vunpack.c.l.b16 %v93
    %v378 = vunpack.c.l.b16 %v94
    %v379 = vunpack.c.l.b16 %v95
    %v380 = vunpack.c.l.b16 %v96
    %v381 = vunpack.c.l.b16 %v97
    %v382 = vunpack.c.l.b16 %v98
    %v383 = vunpack.c.l.b16 %v99
    %v384 = vunpack.c.l.b16 %v100
    %v385 = vunpack.c.l.b16 %v101
    %v386 = vunpack.c.l.b16 %v102
    %v387 = vunpack.c.l.b16 %v103
    %v388 = vunpack.c.l.b16 %v104
    %v389 = vunpack.c.l.b16 %v105
    %v390 = vunpack.c.l.b16 %v106
    %v391 = vunpack.c.l.b16 %v107
    %v392 = vunpack.c.l.b16 %v108
    %v393 = vunpack.c.l.b16 %v109
    %v394 = vunpack.c.l.b16 %v110
    %v395 = vunpack.c.l.b16 %v111
    %v396 = vunpack.c.l.b16 %v112
    %v397 = vunpack.c.l.b16 %v113
    %v398 = vunpack.c.l.b16 %v114
    %v399 = vunpack.c.l.b16 %v115
    %v400 = vunpack.c.l.b16 %v116
    %v401 = vunpack.c.l.b16 %v117
    %v402 = vunpack.c.l.b16 %v118
    %v403 = vunpack.c.l.b16 %v119
    %v404 = vunpack.c.l.b16 %v120
    %v405 = vunpack.c.l.b16 %v121
    %v406 = vunpack.c.l.b16 %v122
    %v407 = vunpack.c.l.b16 %v123
    %v408 = vunpack.c.l.b16 %v124
    %v409 = vunpack.c.l.b16 %v125
    %v410 = vunpack.c.l.b16 %v126
    %v411 = vunpack.c.l.b16 %v127
    %v412 = vunpack.c.l.b16 %v128
    %v413 = vunpack.c.l.b16 %v129
    %v414 = vunpack.c.l.b16 %v130
    %v415 = vunpack.c.l.b16 %v131
    %v416 = vunpack.c.l.b16 %v132
    %v417 = vunpack.c.l.b16 %v133
    %v418 = vunpack.c.l.b16 %v134
    %v419 = vunpack.c.l.b16 %v135
    %v420 = vunpack.c.l.b16 %v136
    %v421 = vunpack.c.l.b16 %v137
    %v422 = vunpack.c.l.b16 %v138
    %v423 = vunpack.c.l.b16 %v139
    %v424 = vunpack.c.l.b16 %v140
    %v425 = vunpack.c.l.b16 %v141
    %v426 = vunpack.c.l.b16 %v142
    %v427 = vunpack.c.l.b16 %v143
    %v428 = vunpack.c.l.b16 %v144
    %v429 = vunpack.c.l.b16 %v145
    %v430 = vunpack.c.l.b16 %v146
    %v431 = vunpack.c.l.b16 %v147
    %v432 = vunpack.c.l.b16 %v148
    %v433 = vunpack.c.l.b16 %v149
    %v434 = vunpack.c.l.b16 %v150
    %v435 = vunpack.c.l.b16 %v151
    %v436 = vunpack.c.l.b16 %v152
    %v437 = vunpack.c.l.b16 %v153
    %v438 = vunpack.c.l.b16 %v154
    %v439 = vunpack.c.l.b16 %v155
    %v440 = vunpack.c.l.b16 %v156
    %v441 = vunpack.c.l.b16 %v157
    %v442 = vunpack.c.l.b16 %v158
    %v443 = vunpack.c.l.b16 %v159
    %v444 = vunpack.c.l.b16 %v160
    %v445 = vunpack.c.l.b16 %v161
    %v446 = vunpack.c.l.b16 %v162
    %v447 = vunpack.c.l.b16 %v163
    %v448 = vunpack.c.l.b16 %v164
    %v449 = vunpack.c.l.b16 %v165
    %v450 = vunpack.c.l.b16 %v166
    %v451 = vunpack.c.l.b16 %v167
    %v452 = vunpack.c.l.b16 %v168
    %v453 = vunpack.c.l.b16 %v169
    %v454 = vunpack.c.l.b16 %v170
    %v455 = vunpack.c.l.b16 %v171
    %v456 = vunpack.c.l.b16 %v172
    %v457 = vunpack.c.l.b16 %v173
    %v458 = vunpack.c.l.b16 %v174
    %v459 = vunpack.c.l.b16 %v175
    %v460 = vunpack.c.l.b16 %v176
    %v461 = vunpack.c.l.b16 %v177
    %v462 = vunpack.c.l.b16 %v178
    %v463 = vunpack.c.l.b16 %v179
    %v464 = vunpack.c.l.b16 %v180
    %v465 = vunpack.c.l.b16 %v181
    %v466 = vunpack.c.l.b16 %v182
    %v467 = vunpack.c.l.b16 %v183
    %v468 = vunpack.c.l.b16 %v184
    %v469 = vunpack.c.l.b16 %v185
    %v470 = vunpack.c.l.b16 %v186
    %v471 = vunpack.c.l.b16 %v187
    %v472 = vunpack.c.l.b16 %v188
    %v473 = vunpack.c.l.b16 %v189
    %v474 = vunpack.c.l.b16 %v190
    %v475 = vunpack.c.l.b16 %v191
    %v476 = vunpack.c.l.b16 %v192
    %v477 = vunpack.c.l.b16 %v193
    %v478 = vunpack.c.l.b16 %v194
    %v479 = vunpack.c.l.b16 %v195
    %v480 = vunpack.c.l.b16 %v196
    %v481 = vunpack.c.l.b16 %v197
    %v482 = vunpack.c.l.b16 %v198
    %v483 = vunpack.c.l.b16 %v199
    %v484 = vunpack.c.l.b16 %v200
    %v485 = vunpack.c.l.b16 %v201
    %v486 = vunpack.c.l.b16 %v202
    %v487 = vunpack.c.l.b16 %v203
    %v488 = vunpack.c.l.b16 %v204
    %v489 = vunpack.c.l.b16 %v205
    %v490 = vunpack.c.l.b16 %v206
    %v491 = vunpack.c.l.b16 %v207
    %v492 = vunpack.c.l.b16 %v208
    %v493 = vunpack.c.l.b16 %v209
    %v494 = vunpack.c.l.b16 %v210
    %v495 = vunpack.c.l.b16 %v211
    %v496 = vunpack.c.l.b16 %v212
    %v497 = vunpack.c.l.b16 %v213
    %v498 = vpack.c.b16 %v371, %v370
    %v499 = vpack.c.b16 %v373, %v372
    %v500 = vpack.c.b16 %v375, %v374
    %v501 = vpack.c.b16 %v377, %v376
    %v502 = vpack.c.b16 %v379, %v378
    %v503 = vpack.c.b16 %v381, %v380
    %v504 = vpack.c.b16 %v383, %v382
    %v505 = vpack.c.b16 %v385, %v384
    %v506 = vpack.c.b16 %v387, %v386
    %v507 = vpack.c.b16 %v389, %v388
    %v508 = vpack.c.b16 %v391, %v390
    %v509 = vpack.c.b16 %v393, %v392
    %v510 = vpack.c.b16 %v395, %v394
    %v511 = vpack.c.b16 %v397, %v396
    %v512 = vpack.c.b16 %v399, %v398
    %v513 = vpack.c.b16 %v401, %v400
    %v514 = vpack.c.b16 %v403, %v402
    %v515 = vpack.c.b16 %v405, %v404
    %v516 = vpack.c.b16 %v407, %v406
    %v517 = vpack.c.b16 %v409, %v408
    %v518 = vpack.c.b16 %v411, %v410
    %v519 = vpack.c.b16 %v413, %v412
    %v520 = vpack.c.b16 %v415, %v414
    %v521 = vpack.c.b16 %v417, %v416
    %v522 = vpack.c.b16 %v419, %v418
    %v523 = vpack.c.b16 %v421, %v420
    %v524 = vpack.c.b16 %v423, %v422
    %v525 = vpack.c.b16 %v425, %v424
    %v526 = vpack.c.b16 %v427, %v426
    %v527 = vpack.c.b16 %v429, %v428
    %v528 = vpack.c.b16 %v431, %v430
    %v529 = vpack.c.b16 %v433, %v432
    %v530 = vpack.c.b16 %v435, %v434
    %v531 = vpack.c.b16 %v437, %v436
    %v532 = vpack.c.b16 %v439, %v438
    %v533 = vpack.c.b16 %v441, %v440
    %v534 = vpack.c.b16 %v443, %v442
    %v535 = vpack.c.b16 %v445, %v444
    %v536 = vpack.c.b16 %v447, %v446
    %v537 = vpack.c.b16 %v449, %v448
    %v538 = vpack.c.b16 %v451, %v450
    %v539 = vpack.c.b16 %v453, %v452
    %v540 = vpack.c.b16 %v455, %v454
    %v541 = vpack.c.b16 %v457, %v456
    %v542 = vpack.c.b16 %v459, %v458
    %v543 = vpack.c.b16 %v461, %v460
    %v544 = vpack.c.b16 %v463, %v462
    %v545 = vpack.c.b16 %v465, %v464
    %v546 = vpack.c.b16 %v467, %v466
    %v547 = vpack.c.b16 %v469, %v468
    %v548 = vpack.c.b16 %v471, %v470
    %v549 = vpack.c.b16 %v473, %v472
    %v550 = vpack.c.b16 %v475, %v474
    %v551 = vpack.c.b16 %v477, %v476
    %v552 = vpack.c.b16 %v479, %v478
    %v553 = vpack.c.b16 %v481, %v480
    %v554 = vpack.c.b16 %v483, %v482
    %v555 = vpack.c.b16 %v485, %v484
    %v556 = vpack.c.b16 %v487, %v486
    %v557 = vpack.c.b16 %v489, %v488
    %v558 = vpack.c.b16 %v491, %v490
    %v559 = vpack.c.b16 %v493, %v492
    %v560 = vpack.c.b16 %v495, %v494
    %v561 = vpack.c.b16 %v497, %v496
    %626 = vmatprep.subr.bf16.mxu0 0
    %627 = vmatpush1.bf16.msra.mxu0 %v505
    %628 = vmatprep.subr.bf16.mxu0 0
    %629 = vmatpush1.bf16.msra.mxu0 %v504
    %630 = vmatprep.subr.bf16.mxu0 0
    %631 = vmatpush1.bf16.msra.mxu0 %v503
    %632 = vmatprep.subr.bf16.mxu0 0
    %633 = vmatpush1.bf16.msra.mxu0 %v502
    %634 = vmatprep.subr.bf16.mxu0 0
    %635 = vmatpush1.bf16.msra.mxu0 %v501
    %636 = vmatprep.subr.bf16.mxu0 0
    %637 = vmatpush1.bf16.msra.mxu0 %v500
    %638 = vmatprep.subr.bf16.mxu0 0
    %639 = vmatpush1.bf16.msra.mxu0 %v499
    %640 = vmatprep.subr.bf16.mxu0 0
    %641 = vmatpush1.bf16.msra.mxu0 %v498
    %642 = vmatprep.subr.bf16.mxu0 0
    %643 = vmatpush2.bf16.msra.mxu0 %v513
    %644 = vmatprep.subr.bf16.mxu0 0
    %645 = vmatpush2.bf16.msra.mxu0 %v512
    %646 = vmatprep.subr.bf16.mxu0 0
    %647 = vmatpush2.bf16.msra.mxu0 %v511
    %648 = vmatprep.subr.bf16.mxu0 0
    %649 = vmatpush2.bf16.msra.mxu0 %v510
    %650 = vmatprep.subr.bf16.mxu0 0
    %651 = vmatpush2.bf16.msra.mxu0 %v509
    %652 = vmatprep.subr.bf16.mxu0 0
    %653 = vmatpush2.bf16.msra.mxu0 %v508
    %654 = vmatprep.subr.bf16.mxu0 0
    %655 = vmatpush2.bf16.msra.mxu0 %v507
    %656 = vmatprep.subr.bf16.mxu0 0
    %657 = vmatpush2.bf16.msra.mxu0 %v506
    %658 = vmatprep.mubr.bf16.mxu0 %v227
    %659 = vmatmul.mubr.bf16.gmra.mxu0 %v226
    %v660 = vpop.f32.mrf.mxu0
    %v661 = vadd.f32 0.0, %v660
    %v662 = vpop.f32.mrf.mxu0
    %v663 = vpop.f32.mrf.mxu0
    %v664 = vpop.f32.mrf.mxu0
    %665 = vdwg.mxu0
    %666 = vmatprep.subr.bf16.mxu0 0
    %667 = vmatpush1.bf16.msra.mxu0 %v521
    %668 = vmatprep.subr.bf16.mxu0 0
    %669 = vmatpush1.bf16.msra.mxu0 %v520
    %670 = vmatprep.subr.bf16.mxu0 0
    %671 = vmatpush1.bf16.msra.mxu0 %v519
    %672 = vmatprep.subr.bf16.mxu0 0
    %673 = vmatpush1.bf16.msra.mxu0 %v518
    %674 = vmatprep.subr.bf16.mxu0 0
    %675 = vmatpush1.bf16.msra.mxu0 %v517
    %676 = vmatprep.subr.bf16.mxu0 0
    %677 = vmatpush1.bf16.msra.mxu0 %v516
    %678 = vmatprep.subr.bf16.mxu0 0
    %679 = vmatpush1.bf16.msra.mxu0 %v515
    %680 = vmatprep.subr.bf16.mxu0 0
    %681 = vmatpush1.bf16.msra.mxu0 %v514
    %682 = vmatprep.subr.bf16.mxu0 0
    %683 = vmatpush2.bf16.msra.mxu0 %v529
    %684 = vmatprep.subr.bf16.mxu0 0
    %685 = vmatpush2.bf16.msra.mxu0 %v528
    %686 = vmatprep.subr.bf16.mxu0 0
    %687 = vmatpush2.bf16.msra.mxu0 %v527
    %688 = vmatprep.subr.bf16.mxu0 0
    %689 = vmatpush2.bf16.msra.mxu0 %v526
    %690 = vmatprep.subr.bf16.mxu0 0
    %691 = vmatpush2.bf16.msra.mxu0 %v525
    %692 = vmatprep.subr.bf16.mxu0 0
    %693 = vmatpush2.bf16.msra.mxu0 %v524
    %694 = vmatprep.subr.bf16.mxu0 0
    %695 = vmatpush2.bf16.msra.mxu0 %v523
    %696 = vmatprep.subr.bf16.mxu0 0
    %697 = vmatpush2.bf16.msra.mxu0 %v522
    %698 = vmatprep.mubr.bf16.mxu0 %v229
    %699 = vmatmul.mubr.bf16.gmra.mxu0 %v228
    %v700 = vpop.f32.mrf.mxu0
    %v701 = vadd.f32 %v661, %v700
    %v702 = vpop.f32.mrf.mxu0
    %v703 = vpop.f32.mrf.mxu0
    %v704 = vpop.f32.mrf.mxu0
    %705 = vdwg.mxu0
    %706 = vmatprep.subr.bf16.mxu0 0
    %707 = vmatpush1.bf16.msra.mxu0 %v537
    %708 = vmatprep.subr.bf16.mxu0 0
    %709 = vmatpush1.bf16.msra.mxu0 %v536
    %710 = vmatprep.subr.bf16.mxu0 0
    %711 = vmatpush1.bf16.msra.mxu0 %v535
    %712 = vmatprep.subr.bf16.mxu0 0
    %713 = vmatpush1.bf16.msra.mxu0 %v534
    %714 = vmatprep.subr.bf16.mxu0 0
    %715 = vmatpush1.bf16.msra.mxu0 %v533
    %716 = vmatprep.subr.bf16.mxu0 0
    %717 = vmatpush1.bf16.msra.mxu0 %v532
    %718 = vmatprep.subr.bf16.mxu0 0
    %719 = vmatpush1.bf16.msra.mxu0 %v531
    %720 = vmatprep.subr.bf16.mxu0 0
    %721 = vmatpush1.bf16.msra.mxu0 %v530
    %722 = vmatprep.subr.bf16.mxu0 0
    %723 = vmatpush2.bf16.msra.mxu0 %v545
    %724 = vmatprep.subr.bf16.mxu0 0
    %725 = vmatpush2.bf16.msra.mxu0 %v544
    %726 = vmatprep.subr.bf16.mxu0 0
    %727 = vmatpush2.bf16.msra.mxu0 %v543
    %728 = vmatprep.subr.bf16.mxu0 0
    %729 = vmatpush2.bf16.msra.mxu0 %v542
    %730 = vmatprep.subr.bf16.mxu0 0
    %731 = vmatpush2.bf16.msra.mxu0 %v541
    %732 = vmatprep.subr.bf16.mxu0 0
    %733 = vmatpush2.bf16.msra.mxu0 %v540
    %734 = vmatprep.subr.bf16.mxu0 0
    %735 = vmatpush2.bf16.msra.mxu0 %v539
    %736 = vmatprep.subr.bf16.mxu0 0
    %737 = vmatpush2.bf16.msra.mxu0 %v538
    %738 = vmatprep.mubr.bf16.mxu0 %v231
    %739 = vmatmul.mubr.bf16.gmra.mxu0 %v230
    %v740 = vpop.f32.mrf.mxu0
    %v741 = vadd.f32 %v701, %v740
    %v742 = vpop.f32.mrf.mxu0
    %v743 = vpop.f32.mrf.mxu0
    %v744 = vpop.f32.mrf.mxu0
    %745 = vdwg.mxu0
    %746 = vmatprep.subr.bf16.mxu0 0
    %747 = vmatpush1.bf16.msra.mxu0 %v553
    %748 = vmatprep.subr.bf16.mxu0 0
    %749 = vmatpush1.bf16.msra.mxu0 %v552
    %750 = vmatprep.subr.bf16.mxu0 0
    %751 = vmatpush1.bf16.msra.mxu0 %v551
    %752 = vmatprep.subr.bf16.mxu0 0
    %753 = vmatpush1.bf16.msra.mxu0 %v550
    %754 = vmatprep.subr.bf16.mxu0 0
    %755 = vmatpush1.bf16.msra.mxu0 %v549
    %756 = vmatprep.subr.bf16.mxu0 0
    %757 = vmatpush1.bf16.msra.mxu0 %v548
    %758 = vmatprep.subr.bf16.mxu0 0
    %759 = vmatpush1.bf16.msra.mxu0 %v547
    %760 = vmatprep.subr.bf16.mxu0 0
    %761 = vmatpush1.bf16.msra.mxu0 %v546
    %762 = vmatprep.subr.bf16.mxu0 0
    %763 = vmatpush2.bf16.msra.mxu0 %v561
    %764 = vmatprep.subr.bf16.mxu0 0
    %765 = vmatpush2.bf16.msra.mxu0 %v560
    %766 = vmatprep.subr.bf16.mxu0 0
    %767 = vmatpush2.bf16.msra.mxu0 %v559
    %768 = vmatprep.subr.bf16.mxu0 0
    %769 = vmatpush2.bf16.msra.mxu0 %v558
    %770 = vmatprep.subr.bf16.mxu0 0
    %771 = vmatpush2.bf16.msra.mxu0 %v557
    %772 = vmatprep.subr.bf16.mxu0 0
    %773 = vmatpush2.bf16.msra.mxu0 %v556
    %774 = vmatprep.subr.bf16.mxu0 0
    %775 = vmatpush2.bf16.msra.mxu0 %v555
    %776 = vmatprep.subr.bf16.mxu0 0
    %777 = vmatpush2.bf16.msra.mxu0 %v554
    %778 = vmatprep.mubr.bf16.mxu0 %v233
    %779 = vmatmul.mubr.bf16.gmra.mxu0 %v232
    %v780 = vpop.f32.mrf.mxu0
    %v781 = vadd.f32 %v741, %v780
    %v782 = vpop.f32.mrf.mxu0
    %v783 = vpop.f32.mrf.mxu0
    %v784 = vpop.f32.mrf.mxu0
    %785 = vdwg.mxu0
    %v786 = vadd.f32 %v81, %v781
    %787 = vst [vmem:[#allocation2] sm:$0xff] %v786
    // Predicated region
    $region42: #{tpu_custom_call.1} parent=1 // pred_check
      %p788 = pneg %p76
    $region43: #{tpu_custom_call.1} parent=1 // pred_check_branch
      %790 = sbr.rel (%p788) target = $region45
    $region44: #{tpu_custom_call.1} parent=1 // pred_region
      %s791 = sld [smem:[#allocation3]]
      %v792 = vstv %s791
      %v793 = vmul.f32 %v792, 1.442695
      %v794 = vpow.pop %v793
      %s795 = vtos %v794
      %v796 = vld [vmem:[#allocation2] sm:$0xff]
      %v797 = vld [vmem:[#allocation9] sm:$0xf]
      %v798 = vld [vmem:[#allocation9 + $0x4] sm:$0xf]
      %v799 = vld [vmem:[#allocation9 + $0x8] sm:$0xf]
      %v800 = vld [vmem:[#allocation9 + $0xc] sm:$0xf]
      %v801 = vld [vmem:[#allocation9 + $0x10] sm:$0xf]
      %v802 = vld [vmem:[#allocation9 + $0x14] sm:$0xf]
      %v803 = vld [vmem:[#allocation9 + $0x18] sm:$0xf]
      %v804 = vld [vmem:[#allocation9 + $0x1c] sm:$0xf]
      %v805 = vld [vmem:[#allocation9 + $0x20] sm:$0xf]
      %v806 = vld [vmem:[#allocation9 + $0x24] sm:$0xf]
      %v807 = vld [vmem:[#allocation9 + $0x28] sm:$0xf]
      %v808 = vld [vmem:[#allocation9 + $0x2c] sm:$0xf]
      %v809 = vld [vmem:[#allocation9 + $0x30] sm:$0xf]
      %v810 = vld [vmem:[#allocation9 + $0x34] sm:$0xf]
      %v811 = vld [vmem:[#allocation9 + $0x38] sm:$0xf]
      %v812 = vld [vmem:[#allocation9 + $0x3c] sm:$0xf]
      %v813 = vld [vmem:[#allocation10] sm:$0xf]
      %v814 = vld [vmem:[#allocation10 + $0x4] sm:$0xf]
      %v815 = vld [vmem:[#allocation10 + $0x8] sm:$0xf]
      %v816 = vld [vmem:[#allocation10 + $0xc] sm:$0xf]
      %v817 = vld [vmem:[#allocation10 + $0x10] sm:$0xf]
      %v818 = vld [vmem:[#allocation10 + $0x14] sm:$0xf]
      %v819 = vld [vmem:[#allocation10 + $0x18] sm:$0xf]
      %v820 = vld [vmem:[#allocation10 + $0x1c] sm:$0xf]
      %v821 = vld [vmem:[#allocation10 + $0x20] sm:$0xf]
      %v822 = vld [vmem:[#allocation10 + $0x24] sm:$0xf]
      %v823 = vld [vmem:[#allocation10 + $0x28] sm:$0xf]
      %v824 = vld [vmem:[#allocation10 + $0x2c] sm:$0xf]
      %v825 = vld [vmem:[#allocation10 + $0x30] sm:$0xf]
      %v826 = vld [vmem:[#allocation10 + $0x34] sm:$0xf]
      %v827 = vld [vmem:[#allocation10 + $0x38] sm:$0xf]
      %v828 = vld [vmem:[#allocation10 + $0x3c] sm:$0xf]
      %v845 = vunpack.c.l.b16 %v797
      %v846 = vunpack.c.l.b16 %v798
      %v847 = vunpack.c.l.b16 %v799
      %v848 = vunpack.c.l.b16 %v800
      %v849 = vunpack.c.l.b16 %v801
      %v850 = vunpack.c.l.b16 %v802
      %v851 = vunpack.c.l.b16 %v803
      %v852 = vunpack.c.l.b16 %v804
      %v853 = vunpack.c.l.b16 %v805
      %v854 = vunpack.c.l.b16 %v806
      %v855 = vunpack.c.l.b16 %v807
      %v856 = vunpack.c.l.b16 %v808
      %v857 = vunpack.c.l.b16 %v809
      %v858 = vunpack.c.l.b16 %v810
      %v859 = vunpack.c.l.b16 %v811
      %v860 = vunpack.c.l.b16 %v812
      %v861 = vpack.c.b16 %v846, %v845
      %v862 = vpack.c.b16 %v848, %v847
      %v863 = vpack.c.b16 %v850, %v849
      %v864 = vpack.c.b16 %v852, %v851
      %v865 = vpack.c.b16 %v854, %v853
      %v866 = vpack.c.b16 %v856, %v855
      %v867 = vpack.c.b16 %v858, %v857
      %v868 = vpack.c.b16 %v860, %v859
      %v893 = vunpack.c.l.b16 %v813
      %v894 = vunpack.c.l.b16 %v814
      %v895 = vunpack.c.l.b16 %v815
      %v896 = vunpack.c.l.b16 %v816
      %v897 = vunpack.c.l.b16 %v817
      %v898 = vunpack.c.l.b16 %v818
      %v899 = vunpack.c.l.b16 %v819
      %v900 = vunpack.c.l.b16 %v820
      %v901 = vunpack.c.l.b16 %v821
      %v902 = vunpack.c.l.b16 %v822
      %v903 = vunpack.c.l.b16 %v823
      %v904 = vunpack.c.l.b16 %v824
      %v905 = vunpack.c.l.b16 %v825
      %v906 = vunpack.c.l.b16 %v826
      %v907 = vunpack.c.l.b16 %v827
      %v908 = vunpack.c.l.b16 %v828
      %v909 = vpack.c.b16 %v894, %v893
      %v910 = vpack.c.b16 %v896, %v895
      %v911 = vpack.c.b16 %v898, %v897
      %v912 = vpack.c.b16 %v900, %v899
      %v913 = vpack.c.b16 %v902, %v901
      %v914 = vpack.c.b16 %v904, %v903
      %v915 = vpack.c.b16 %v906, %v905
      %v916 = vpack.c.b16 %v908, %v907
      %925 = vmatprep.subr.bf16.mxu0 0
      %926 = vmatpush1.bf16.msra.mxu0 %v916
      %927 = vmatprep.subr.bf16.mxu0 0
      %928 = vmatpush1.bf16.msra.mxu0 %v915
      %929 = vmatprep.subr.bf16.mxu0 0
      %930 = vmatpush1.bf16.msra.mxu0 %v914
      %931 = vmatprep.subr.bf16.mxu0 0
      %932 = vmatpush1.bf16.msra.mxu0 %v913
      %933 = vmatprep.subr.bf16.mxu0 0
      %934 = vmatpush1.bf16.msra.mxu0 %v912
      %935 = vmatprep.subr.bf16.mxu0 0
      %936 = vmatpush1.bf16.msra.mxu0 %v911
      %937 = vmatprep.subr.bf16.mxu0 0
      %938 = vmatpush1.bf16.msra.mxu0 %v910
      %939 = vmatprep.subr.bf16.mxu0 0
      %940 = vmatpush1.bf16.msra.mxu0 %v909
      %941 = vmatprep.subr.bf16.mxu0 0
      %942 = vmatpush2.bf16.msra.mxu0 0
      %943 = vmatprep.subr.bf16.mxu0 0
      %944 = vmatpush2.bf16.msra.mxu0 0
      %945 = vmatprep.subr.bf16.mxu0 0
      %946 = vmatpush2.bf16.msra.mxu0 0
      %947 = vmatprep.subr.bf16.mxu0 0
      %948 = vmatpush2.bf16.msra.mxu0 0
      %949 = vmatprep.subr.bf16.mxu0 0
      %950 = vmatpush2.bf16.msra.mxu0 0
      %951 = vmatprep.subr.bf16.mxu0 0
      %952 = vmatpush2.bf16.msra.mxu0 0
      %953 = vmatprep.subr.bf16.mxu0 0
      %954 = vmatpush2.bf16.msra.mxu0 0
      %955 = vmatprep.subr.bf16.mxu0 0
      %956 = vmatpush2.bf16.msra.mxu0 0
      %957 = vmatprep.mubr.bf16.mxu0 0
      %958 = vmatmul.mubr.bf16.gmra.mxu0 %v861
      %v959 = vpop.f32.mrf.mxu0
      %v960 = vadd.f32 0.0, %v959
      %v961 = vpop.f32.mrf.mxu0
      %v962 = vpop.f32.mrf.mxu0
      %v963 = vadd.f32 0.0, %v962
      %v964 = vpop.f32.mrf.mxu0
      %965 = vmatprep.mubr.bf16.mxu0 0
      %966 = vmatmul.mubr.bf16.gmra.mxu0 %v862
      %v967 = vpop.f32.mrf.mxu0
      %v968 = vadd.f32 0.0, %v967
      %v969 = vpop.f32.mrf.mxu0
      %v970 = vpop.f32.mrf.mxu0
      %v971 = vadd.f32 0.0, %v970
      %v972 = vpop.f32.mrf.mxu0
      %973 = vmatprep.mubr.bf16.mxu0 0
      %974 = vmatmul.mubr.bf16.gmra.mxu0 %v863
      %v975 = vpop.f32.mrf.mxu0
      %v976 = vadd.f32 0.0, %v975
      %v977 = vpop.f32.mrf.mxu0
      %v978 = vpop.f32.mrf.mxu0
      %v979 = vadd.f32 0.0, %v978
      %v980 = vpop.f32.mrf.mxu0
      %981 = vmatprep.mubr.bf16.mxu0 0
      %982 = vmatmul.mubr.bf16.gmra.mxu0 %v864
      %v983 = vpop.f32.mrf.mxu0
      %v984 = vadd.f32 0.0, %v983
      %v985 = vpop.f32.mrf.mxu0
      %v986 = vpop.f32.mrf.mxu0
      %v987 = vadd.f32 0.0, %v986
      %v988 = vpop.f32.mrf.mxu0
      %989 = vmatprep.mubr.bf16.mxu0 0
      %990 = vmatmul.mubr.bf16.gmra.mxu0 %v865
      %v991 = vpop.f32.mrf.mxu0
      %v992 = vadd.f32 0.0, %v991
      %v993 = vpop.f32.mrf.mxu0
      %v994 = vpop.f32.mrf.mxu0
      %v995 = vadd.f32 0.0, %v994
      %v996 = vpop.f32.mrf.mxu0
      %997 = vmatprep.mubr.bf16.mxu0 0
      %998 = vmatmul.mubr.bf16.gmra.mxu0 %v866
      %v999 = vpop.f32.mrf.mxu0
      %v1000 = vadd.f32 0.0, %v999
      %v1001 = vpop.f32.mrf.mxu0
      %v1002 = vpop.f32.mrf.mxu0
      %v1003 = vadd.f32 0.0, %v1002
      %v1004 = vpop.f32.mrf.mxu0
      %1005 = vmatprep.mubr.bf16.mxu0 0
      %1006 = vmatmul.mubr.bf16.gmra.mxu0 %v867
      %v1007 = vpop.f32.mrf.mxu0
      %v1008 = vadd.f32 0.0, %v1007
      %v1009 = vpop.f32.mrf.mxu0
      %v1010 = vpop.f32.mrf.mxu0
      %v1011 = vadd.f32 0.0, %v1010
      %v1012 = vpop.f32.mrf.mxu0
      %1013 = vmatprep.mubr.bf16.mxu0 0
      %1014 = vmatmul.mubr.bf16.gmra.mxu0 %v868
      %v1015 = vpop.f32.mrf.mxu0
      %v1016 = vadd.f32 0.0, %v1015
      %v1017 = vpop.f32.mrf.mxu0
      %v1018 = vpop.f32.mrf.mxu0
      %v1019 = vadd.f32 0.0, %v1018
      %v1020 = vpop.f32.mrf.mxu0
      %1021 = vdwg.mxu0
      %v1022 = vmul.f32 %v796, %v796
      %1023 = vadd.xlane.f32.xlu0 %v1022
      %v1024 = vpop.xlane.xlu0 %1023
      %v1025 = vmul.f32 %v960, %v960
      %v1026 = vmul.f32 %v963, %v963
      %v1027 = vmul.f32 %v968, %v968
      %v1028 = vmul.f32 %v971, %v971
      %v1029 = vmul.f32 %v976, %v976
      %v1030 = vmul.f32 %v979, %v979
      %v1031 = vmul.f32 %v984, %v984
      %v1032 = vmul.f32 %v987, %v987
      %v1033 = vmul.f32 %v992, %v992
      %v1034 = vmul.f32 %v995, %v995
      %v1035 = vmul.f32 %v1000, %v1000
      %v1036 = vmul.f32 %v1003, %v1003
      %v1037 = vmul.f32 %v1008, %v1008
      %v1038 = vmul.f32 %v1011, %v1011
      %v1039 = vmul.f32 %v1016, %v1016
      %v1040 = vmul.f32 %v1019, %v1019
      %1041 = vadd.xlane.f32.xlu0 %v1025
      %v1042 = vpop.xlane.xlu0 %1041
      %1043 = vadd.xlane.f32.xlu0 %v1026
      %v1044 = vpop.xlane.xlu0 %1043
      %1045 = vadd.xlane.f32.xlu0 %v1027
      %v1046 = vpop.xlane.xlu0 %1045
      %1047 = vadd.xlane.f32.xlu0 %v1028
      %v1048 = vpop.xlane.xlu0 %1047
      %1049 = vadd.xlane.f32.xlu0 %v1029
      %v1050 = vpop.xlane.xlu0 %1049
      %1051 = vadd.xlane.f32.xlu0 %v1030
      %v1052 = vpop.xlane.xlu0 %1051
      %1053 = vadd.xlane.f32.xlu0 %v1031
      %v1054 = vpop.xlane.xlu0 %1053
      %1055 = vadd.xlane.f32.xlu0 %v1032
      %v1056 = vpop.xlane.xlu0 %1055
      %1057 = vadd.xlane.f32.xlu0 %v1033
      %v1058 = vpop.xlane.xlu0 %1057
      %1059 = vadd.xlane.f32.xlu0 %v1034
      %v1060 = vpop.xlane.xlu0 %1059
      %1061 = vadd.xlane.f32.xlu0 %v1035
      %v1062 = vpop.xlane.xlu0 %1061
      %1063 = vadd.xlane.f32.xlu0 %v1036
      %v1064 = vpop.xlane.xlu0 %1063
      %1065 = vadd.xlane.f32.xlu0 %v1037
      %v1066 = vpop.xlane.xlu0 %1065
      %1067 = vadd.xlane.f32.xlu0 %v1038
      %v1068 = vpop.xlane.xlu0 %1067
      %1069 = vadd.xlane.f32.xlu0 %v1039
      %v1070 = vpop.xlane.xlu0 %1069
      %1071 = vadd.xlane.f32.xlu0 %v1040
      %v1072 = vpop.xlane.xlu0 %1071
      %v1073 = vmax.f32 %v1024, 1e-30
      %v1074 = vrsqrt.pop %v1073
      %v1075 = vstv %s795
      %v1076 = vmul.f32 %v1075, %v1074
      %v1077 = vmul.f32 %v796, %v1076
      %v1078 = vpack.c.bf16 %v1077, %v1077
      %v1079 = vmax.f32 %v1042, 1e-30
      %v1080 = vmax.f32 %v1044, 1e-30
      %v1081 = vmax.f32 %v1046, 1e-30
      %v1082 = vmax.f32 %v1048, 1e-30
      %v1083 = vmax.f32 %v1050, 1e-30
      %v1084 = vmax.f32 %v1052, 1e-30
      %v1085 = vmax.f32 %v1054, 1e-30
      %v1086 = vmax.f32 %v1056, 1e-30
      %v1087 = vmax.f32 %v1058, 1e-30
      %v1088 = vmax.f32 %v1060, 1e-30
      %v1089 = vmax.f32 %v1062, 1e-30
      %v1090 = vmax.f32 %v1064, 1e-30
      %v1091 = vmax.f32 %v1066, 1e-30
      %v1092 = vmax.f32 %v1068, 1e-30
      %v1093 = vmax.f32 %v1070, 1e-30
      %v1094 = vmax.f32 %v1072, 1e-30
      %v1095 = vrsqrt.pop %v1079
      %v1096 = vrsqrt.pop %v1080
      %v1097 = vrsqrt.pop %v1081
      %v1098 = vrsqrt.pop %v1082
      %v1099 = vrsqrt.pop %v1083
      %v1100 = vrsqrt.pop %v1084
      %v1101 = vrsqrt.pop %v1085
      %v1102 = vrsqrt.pop %v1086
      %v1103 = vrsqrt.pop %v1087
      %v1104 = vrsqrt.pop %v1088
      %v1105 = vrsqrt.pop %v1089
      %v1106 = vrsqrt.pop %v1090
      %v1107 = vrsqrt.pop %v1091
      %v1108 = vrsqrt.pop %v1092
      %v1109 = vrsqrt.pop %v1093
      %v1110 = vrsqrt.pop %v1094
      %v1111 = vmul.f32 %v960, %v1095
      %v1112 = vmul.f32 %v963, %v1096
      %v1113 = vmul.f32 %v968, %v1097
      %v1114 = vmul.f32 %v971, %v1098
      %v1115 = vmul.f32 %v976, %v1099
      %v1116 = vmul.f32 %v979, %v1100
      %v1117 = vmul.f32 %v984, %v1101
      %v1118 = vmul.f32 %v987, %v1102
      %v1119 = vmul.f32 %v992, %v1103
      %v1120 = vmul.f32 %v995, %v1104
      %v1121 = vmul.f32 %v1000, %v1105
      %v1122 = vmul.f32 %v1003, %v1106
      %v1123 = vmul.f32 %v1008, %v1107
      %v1124 = vmul.f32 %v1011, %v1108
      %v1125 = vmul.f32 %v1016, %v1109
      %v1126 = vmul.f32 %v1019, %v1110
      %v1127 = vpack.c.bf16 %v1112, %v1111
      %v1128 = vpack.c.bf16 %v1114, %v1113
      %v1129 = vpack.c.bf16 %v1116, %v1115
      %v1130 = vpack.c.bf16 %v1118, %v1117
      %v1131 = vpack.c.bf16 %v1120, %v1119
      %v1132 = vpack.c.bf16 %v1122, %v1121
      %v1133 = vpack.c.bf16 %v1124, %v1123
      %v1134 = vpack.c.bf16 %v1126, %v1125
      %1135 = vmatprep.subr.bf16.mxu0 0
      %1136 = vmatpush1.bf16.xpose.msra.mxu0 %v1134
      %1137 = vmatprep.subr.bf16.mxu0 0
      %1138 = vmatpush1.bf16.xpose.msra.mxu0 %v1133
      %1139 = vmatprep.subr.bf16.mxu0 0
      %1140 = vmatpush1.bf16.xpose.msra.mxu0 %v1132
      %1141 = vmatprep.subr.bf16.mxu0 0
      %1142 = vmatpush1.bf16.xpose.msra.mxu0 %v1131
      %1143 = vmatprep.subr.bf16.mxu0 0
      %1144 = vmatpush1.bf16.xpose.msra.mxu0 %v1130
      %1145 = vmatprep.subr.bf16.mxu0 0
      %1146 = vmatpush1.bf16.xpose.msra.mxu0 %v1129
      %1147 = vmatprep.subr.bf16.mxu0 0
      %1148 = vmatpush1.bf16.xpose.msra.mxu0 %v1128
      %1149 = vmatprep.subr.bf16.mxu0 0
      %1150 = vmatpush1.bf16.xpose.msra.mxu0 %v1127
      %1151 = vmatprep.subr.bf16.mxu0 0
      %1152 = vmatpush2.bf16.xpose.msra.mxu0 0
      %1153 = vmatprep.subr.bf16.mxu0 0
      %1154 = vmatpush2.bf16.xpose.msra.mxu0 0
      %1155 = vmatprep.subr.bf16.mxu0 0
      %1156 = vmatpush2.bf16.xpose.msra.mxu0 0
      %1157 = vmatprep.subr.bf16.mxu0 0
      %1158 = vmatpush2.bf16.xpose.msra.mxu0 0
      %1159 = vmatprep.subr.bf16.mxu0 0
      %1160 = vmatpush2.bf16.xpose.msra.mxu0 0
      %1161 = vmatprep.subr.bf16.mxu0 0
      %1162 = vmatpush2.bf16.xpose.msra.mxu0 0
      %1163 = vmatprep.subr.bf16.mxu0 0
      %1164 = vmatpush2.bf16.xpose.msra.mxu0 0
      %1165 = vmatprep.subr.bf16.mxu0 0
      %1166 = vmatpush2.bf16.xpose.msra.mxu0 0
      %1167 = vmatprep.mubr.bf16.mxu0 0
      %1168 = vmatmul.mubr.bf16.gmra.mxu0 %v1078
      %v1169 = vpop.f32.mrf.mxu0
      %v1170 = vadd.f32 0.0, %v1169
      %v1171 = vpop.f32.mrf.mxu0
      %v1172 = vpop.f32.mrf.mxu0
      %v1173 = vpop.f32.mrf.mxu0
      %1174 = vdwg.mxu0
      %1175 = vst [vmem:[#allocation12] sm:$0xff] %v1170
    $region45: #{tpu_custom_call.1} parent=1 // pred_fallthru
      _
    // Predicated region
    $region46: #{tpu_custom_call.1} parent=1 // pred_check
      _
    $region47: #{tpu_custom_call.1} parent=1 // pred_check_branch
      %1177 = sbr.rel (0) target = $region49
    $region48: #{tpu_custom_call.1} parent=1 // pred_region
      %s1179 = ssub.s32 128, 128
      %1180 = vsyncadd [#allocation6], %s1179
      %s1182 = sshll.u32 [#allocation12], 4
      %s1183 = int_to_ptr.vmem [resolvable:$true] %s1182
      %1185 = dma.vmem_to_hbm [thread:$0]  %s1183, 128, %s5, [#allocation6]
    $region49: #{tpu_custom_call.1} parent=1 // pred_fallthru
      _
    // Predicated region
    $region50: #{tpu_custom_call.1} parent=1 // pred_check
      _
    $region51: #{tpu_custom_call.1} parent=1 // pred_check_branch
      %1187 = sbr.rel (0) target = $region53
    $region52: #{tpu_custom_call.1} parent=1 // pred_region
      %1188 = dma.done [#allocation6], 128
    $region53: #{tpu_custom_call.1} parent=1 // pred_fallthru
      _
    %1189 = vsyncpa [#allocation5], 1
    %1190 = vsyncpa [#allocation8], 1
    %1191 = vsyncpa [#allocation11], 1
    %1192 = vsyncpa [#allocation6], 1

</llo_original>
